<compile_context>
chip_gen: v7x
topology: tpu7x:2x2x1
jax: 0.10.0
libtpu: 0.0.40
codegen_flags: <defaults>
</compile_context>

<pallas_src>
import jax
import jax.numpy as jnp
from jax.experimental import pallas as pl
from jax.experimental.pallas import tpu as pltpu


def _linear_relu_kernel(x_ref, w_ref, b_ref, o_ref):
    # x_ref: (M, K), w_ref: (K, N) (pre-transposed / block-diagonal at init),
    # b_ref: (1, N). Straight MXU contraction, bias broadcast over rows, ReLU.
    y = jnp.dot(x_ref[...], w_ref[...], preferred_element_type=jnp.float32)
    o_ref[...] = jnp.maximum(y + b_ref[...], 0.0).astype(o_ref.dtype)


def init_linear_params(weight, bias, *, lane_width=128):
    """One-time packing of nn.Linear params (init-time cost, not per-call).

    weight: (OUT, IN) PyTorch layout, bias: (OUT,).
    """
    out_f, in_f = weight.shape
    w_t = weight.T                                   # (IN, OUT) for (M,K)x(K,N)
    bias2d = bias.reshape(1, out_f)
    pack = max(1, lane_width // out_f)               # 8 for OUT=16
    # Block-diagonal weight: 8 copies of W^T on the diagonal -> (128, 128).
    w_bd = jnp.kron(jnp.eye(pack, dtype=weight.dtype), w_t)
    bias_pk = jnp.tile(bias, pack).reshape(1, pack * out_f)   # (1, 128)
    return dict(w_t=w_t, bias2d=bias2d, w_bd=w_bd, bias_pk=bias_pk, pack=pack)


def linear_relu(x, params, *, batch_tile=None, min_batched=1024):
    """x: (B, IN) f32. Returns relu(x @ W^T + b), shape (B, OUT)."""
    B, in_f = x.shape
    w_t = params["w_t"]
    out_f = w_t.shape[1]
    itemsize = x.dtype.itemsize

    if B < min_batched:
        # Small-batch path (the spec's B=1): single whole-array block, no grid,
        # no per-step pipeline overhead. Purely launch/DMA-descriptor bound.
        return pl.pallas_call(
            _linear_relu_kernel,
            out_shape=jax.ShapeDtypeStruct((B, out_f), x.dtype),
            cost_estimate=pl.CostEstimate(
                flops=2 * B * in_f * out_f,
                transcendentals=0,
                bytes_accessed=(B * in_f + in_f * out_f + out_f + B * out_f)
                * itemsize,
            ),
        )(x, w_t, params["bias2d"])

    # ---- Batched, lane-dense path ----
    pack = params["pack"]
    row_align = pack * 8                 # keeps packed sublane dim a multiple of 8
    if batch_tile is None:
        # Big tiles (amortize ~0.35us/grid-step) but keep >=2 grid steps so the
        # v7x 2-TC "parallel" sharding has something to split.
        batch_tile = min(
            8192, max(row_align, pl.cdiv(pl.cdiv(B, 2), row_align) * row_align)
        )
    else:
        batch_tile = max(row_align, pl.cdiv(batch_tile, row_align) * row_align)

    num_tiles = pl.cdiv(B, batch_tile)
    b_pad = num_tiles * batch_tile
    if b_pad != B:
        x = jnp.pad(x, ((0, b_pad - B), (0, 0)))     # pad batch up to whole tiles

    # Lane-dense packing: 8 logical rows per physical row -> last dim = 128.
    x_pk = x.reshape(b_pad // pack, pack * in_f)
    rows = batch_tile // pack
    k_dim = pack * in_f
    n_dim = pack * out_f

    out_pk = pl.pallas_call(
        _linear_relu_kernel,
        out_shape=jax.ShapeDtypeStruct((b_pad // pack, n_dim), x.dtype),
        grid=(num_tiles,),
        in_specs=[
            pl.BlockSpec((rows, k_dim), lambda i: (i, 0)),
            pl.BlockSpec((k_dim, n_dim), lambda i: (0, 0)),   # weight replicated
            pl.BlockSpec((1, n_dim), lambda i: (0, 0)),       # bias replicated
        ],
        out_specs=pl.BlockSpec((rows, n_dim), lambda i: (i, 0)),
        compiler_params=pltpu.CompilerParams(
            dimension_semantics=("parallel",)),
        cost_estimate=pl.CostEstimate(
            flops=2 * b_pad * in_f * out_f,
            transcendentals=0,
            bytes_accessed=(b_pad * in_f + k_dim * n_dim + n_dim + b_pad * out_f)
            * itemsize,
        ),
    )(x_pk, params["w_bd"], params["bias_pk"])

    out = out_pk.reshape(b_pad, out_f)
    return out if b_pad == B else out[:B]


if __name__ == "__main__":
    key = jax.random.PRNGKey(0)
    k_x, k_w, k_b, k_xb = jax.random.split(key, 4)

    IN_F, OUT_F = 16, 16

    # Deterministic init (mimics nn.Linear's uniform(-1/sqrt(in), 1/sqrt(in)))
    bound = 1.0 / jnp.sqrt(jnp.float32(IN_F))
    weight = jax.random.uniform(k_w, (OUT_F, IN_F), jnp.float32, -bound, bound)
    bias = jax.random.uniform(k_b, (OUT_F,), jnp.float32, -bound, bound)
    params = init_linear_params(weight, bias)

    # Spec input: x2 = torch.randn(1, 16)
    x2 = jax.random.normal(k_x, (1, IN_F), jnp.float32)
    out = linear_relu(x2, params)
    jax.block_until_ready(out)
    ref = jnp.maximum(x2 @ weight.T + bias, 0.0)
    assert out.shape == (1, OUT_F)
    assert jnp.allclose(out, ref, atol=1e-5, rtol=1e-5)

    # Exercise the batched lane-dense path (packing + padding + 2-step grid).
    B_BIG = 2500                                   # not a multiple of the tile
    x_big = jax.random.normal(k_xb, (B_BIG, IN_F), jnp.float32)
    out_big = linear_relu(x_big, params)
    jax.block_until_ready(out_big)
    ref_big = jnp.maximum(x_big @ weight.T + bias, 0.0)
    assert out_big.shape == (B_BIG, OUT_F)
    assert jnp.allclose(out_big, ref_big, atol=1e-4, rtol=1e-4)

    print("KERNEL_OK")
</pallas_src>

<mosaic_0001>
module attributes {stable_mosaic.version = 11 : i64} {
  func.func @_linear_relu_kernel(%arg0: memref<1x16xf32, #tpu.memory_space<vmem>>, %arg1: memref<16x16xf32, #tpu.memory_space<vmem>>, %arg2: memref<1x16xf32, #tpu.memory_space<vmem>>, %arg3: memref<1x16xf32, #tpu.memory_space<vmem>>) attributes {dimension_semantics = [], scalar_prefetch = 0 : i64, scratch_operands = 0 : i64, tpu.core_type = #tpu.core_type<tc>} {
    %c0 = arith.constant 0 : index
    %c0_0 = arith.constant 0 : index
    %0 = vector.load %arg0[%c0, %c0_0] : memref<1x16xf32, #tpu.memory_space<vmem>>, vector<1x16xf32>
    %c0_1 = arith.constant 0 : index
    %c0_2 = arith.constant 0 : index
    %1 = vector.load %arg1[%c0_1, %c0_2] : memref<16x16xf32, #tpu.memory_space<vmem>>, vector<16x16xf32>
    %cst = arith.constant dense<0.000000e+00> : vector<1x16xf32>
    %2 = tpu.matmul %0, %1, %cst {dimension_numbers = #tpu.dot_dimension_numbers<[1], [0], [0], [1], [0, 0, 1, 1], [], []>} : vector<1x16xf32>, vector<16x16xf32>, vector<1x16xf32> -> vector<1x16xf32>
    %c0_3 = arith.constant 0 : index
    %c0_4 = arith.constant 0 : index
    %3 = vector.load %arg2[%c0_3, %c0_4] : memref<1x16xf32, #tpu.memory_space<vmem>>, vector<1x16xf32>
    %4 = arith.addf %2, %3 : vector<1x16xf32>
    %cst_5 = arith.constant 0.000000e+00 : f32
    %5 = vector.broadcast %cst_5 : f32 to vector<1x16xf32>
    %6 = arith.maximumf %4, %5 : vector<1x16xf32>
    %c0_6 = arith.constant 0 : index
    %c0_7 = arith.constant 0 : index
    %7 = vector.load %arg3[%c0_6, %c0_7] : memref<1x16xf32, #tpu.memory_space<vmem>>, vector<1x16xf32>
    tpu.vector_store %arg3[%c0_6, %c0_7], %6 {strides = array<i32>} : memref<1x16xf32, #tpu.memory_space<vmem>>, vector<1x16xf32>,
    return
  }
}

</mosaic_0001>

<llo_original>
// kernel: tpu_custom_call.1
$region0: #{tpu_custom_call.1}
  #allocation0 [shape = 'u32[]', space=smem, size = 0x4, offset = 0x4, fixed_abs, tag = 'smem constant byte address 0x4 - core index']
  #allocation1 [shape = 'u32[144,128]{1,0:T(1,128)}', space=vmem, size = 0x12000, scoped, tag = 'internal scratch']
  %s0 = inlined_call_operand.hbm [shape: f32[1,16], index: 0, kind: input, shape index: {}]
  %s1 = inlined_call_operand.hbm [shape: f32[16,16], index: 1, kind: input, shape index: {}]
  %s2 = inlined_call_operand.vmem [shape: f32[1,16], index: 2, kind: input, shape index: {}]
  %s3 = inlined_call_operand.hbm [shape: f32[1,16], index: 3, kind: output, shape index: {}]
  %s4 = sld [smem:[#allocation0]]
  $region30: #{tpu_custom_call.1} parent=0
    _
  %s6 = ssub.s32 1, %s4
  %s7 = scalar_select 0, %s6, %s4
  $region1: #{tpu_custom_call.1} parent=0
    #allocation2 [shape = 'u8[512]{0}', space=vmem, size = 0x400, scoped, tag = 'input window, operand 0, single buffered']
    #allocation3 [shape = 's32[1]{0}', space=sflag, size = 0x4, scoped, tag = 'scoped memory for tpu_custom_call.1']
    #allocation4 [shape = 's32[1]{0}', space=sflag, size = 0x4, scoped, tag = 'scoped memory for tpu_custom_call.1']
    #allocation5 [shape = 'u8[8192]{0}', space=vmem, size = 0x2000, scoped, tag = 'input window, operand 1, single buffered']
    #allocation6 [shape = 's32[1]{0}', space=sflag, size = 0x4, scoped, tag = 'scoped memory for tpu_custom_call.1']
    #allocation7 [shape = 'u8[512]{0}', space=vmem, size = 0x400, scoped, tag = 'output window, operand 0, single buffered']
    %8 = vsyncpa [#allocation3], 0
    %9 = vsyncpa [#allocation6], 0
    %10 = vsyncpa [#allocation4], 0
    // Predicated region
    $region2: #{tpu_custom_call.1} parent=1 // pred_check
      _
    $region3: #{tpu_custom_call.1} parent=1 // pred_check_branch
      %12 = sbr.rel (0) target = $region5
    $region4: #{tpu_custom_call.1} parent=1 // pred_region
      %s14 = ssub.s32 16, 16
      %15 = vsyncadd [#allocation3], %s14
      %s17 = sshll.u32 [#allocation2], 4
      %s18 = int_to_ptr.vmem [resolvable:$true] %s17
      %20 = dma.hbm_to_vmem [thread:$0]  %s0, 16, %s18, [#allocation3]
    $region5: #{tpu_custom_call.1} parent=1 // pred_fallthru
      _
    // Predicated region
    $region6: #{tpu_custom_call.1} parent=1 // pred_check
      _
    $region7: #{tpu_custom_call.1} parent=1 // pred_check_branch
      %22 = sbr.rel (0) target = $region9
    $region8: #{tpu_custom_call.1} parent=1 // pred_region
      %s24 = ssub.s32 256, 256
      %25 = vsyncadd [#allocation6], %s24
      %s26 = sshll.u32 [#allocation5], 4
      %s27 = int_to_ptr.vmem [resolvable:$true] %s26
      %32 = dma.hbm_to_vmem [thread:$0]  %s1, 256, %s27, [#allocation6], 128, 128, 8
    $region9: #{tpu_custom_call.1} parent=1 // pred_fallthru
      _
    // Predicated region
    $region10: #{tpu_custom_call.1} parent=1 // pred_check
      _
    $region11: #{tpu_custom_call.1} parent=1 // pred_check_branch
      %34 = sbr.rel (0) target = $region13
    $region12: #{tpu_custom_call.1} parent=1 // pred_region
      _
    $region13: #{tpu_custom_call.1} parent=1 // pred_fallthru
      _
    // Predicated region
    $region14: #{tpu_custom_call.1} parent=1 // pred_check
      _
    $region15: #{tpu_custom_call.1} parent=1 // pred_check_branch
      %36 = sbr.rel (0) target = $region17
    $region16: #{tpu_custom_call.1} parent=1 // pred_region
      %37 = dma.done [#allocation3], 16
    $region17: #{tpu_custom_call.1} parent=1 // pred_fallthru
      _
    // Predicated region
    $region18: #{tpu_custom_call.1} parent=1 // pred_check
      _
    $region19: #{tpu_custom_call.1} parent=1 // pred_check_branch
      %39 = sbr.rel (0) target = $region21
    $region20: #{tpu_custom_call.1} parent=1 // pred_region
      %40 = dma.done [#allocation6], 256
    $region21: #{tpu_custom_call.1} parent=1 // pred_fallthru
      _
    %v41 = vld [vmem:[#allocation2] sm:$0x1]
    %v42 = vld [vmem:[#allocation5] sm:$0xff]
    %v43 = vld [vmem:[#allocation5 + $0x8] sm:$0xff]
    %v44 = vld [vmem:[%s2] sm:$0x1]
    %vm45 = vcmask 130048
    %v47 = vsel %vm45, %v41, 0
    %49 = vmatprep.subr.mxu0 0.0
    %50 = vmatpush1.msra.mxu0 %v42
    %51 = vmatprep.subr.mxu0 0.0
    %52 = vmatpush1.msra.mxu0 %v43
    %53 = vmatprep.subr.mxu0 0.0
    %54 = vmatpush1.msra.mxu0 0.0
    %55 = vmatprep.subr.mxu0 0.0
    %56 = vmatpush1.msra.mxu0 0.0
    %57 = vmatprep.subr.mxu0 0.0
    %58 = vmatpush1.msra.mxu0 0.0
    %59 = vmatprep.subr.mxu0 0.0
    %60 = vmatpush1.msra.mxu0 0.0
    %61 = vmatprep.subr.mxu0 0.0
    %62 = vmatpush1.msra.mxu0 0.0
    %63 = vmatprep.subr.mxu0 0.0
    %64 = vmatpush1.msra.mxu0 0.0
    %65 = vmatprep.subr.mxu0 0.0
    %66 = vmatpush1.msra.mxu0 0.0
    %67 = vmatprep.subr.mxu0 0.0
    %68 = vmatpush1.msra.mxu0 0.0
    %69 = vmatprep.subr.mxu0 0.0
    %70 = vmatpush1.msra.mxu0 0.0
    %71 = vmatprep.subr.mxu0 0.0
    %72 = vmatpush1.msra.mxu0 0.0
    %73 = vmatprep.subr.mxu0 0.0
    %74 = vmatpush1.msra.mxu0 0.0
    %75 = vmatprep.subr.mxu0 0.0
    %76 = vmatpush1.msra.mxu0 0.0
    %77 = vmatprep.subr.mxu0 0.0
    %78 = vmatpush1.msra.mxu0 0.0
    %79 = vmatprep.subr.mxu0 0.0
    %80 = vmatpush1.msra.mxu0 0.0
    %81 = vmatprep.subr.mxu0 0.0
    %82 = vmatpush1.msra.mxu0 0.0
    %83 = vmatprep.subr.mxu0 0.0
    %84 = vmatpush1.msra.mxu0 0.0
    %85 = vmatprep.subr.mxu0 0.0
    %86 = vmatpush1.msra.mxu0 0.0
    %87 = vmatprep.subr.mxu0 0.0
    %88 = vmatpush1.msra.mxu0 0.0
    %89 = vmatprep.subr.mxu0 0.0
    %90 = vmatpush1.msra.mxu0 0.0
    %91 = vmatprep.subr.mxu0 0.0
    %92 = vmatpush1.msra.mxu0 0.0
    %93 = vmatprep.subr.mxu0 0.0
    %94 = vmatpush1.msra.mxu0 0.0
    %95 = vmatprep.subr.mxu0 0.0
    %96 = vmatpush1.msra.mxu0 0.0
    %97 = vmatprep.subr.mxu0 0.0
    %98 = vmatpush1.msra.mxu0 0.0
    %99 = vmatprep.subr.mxu0 0.0
    %100 = vmatpush1.msra.mxu0 0.0
    %101 = vmatprep.subr.mxu0 0.0
    %102 = vmatpush1.msra.mxu0 0.0
    %103 = vmatprep.subr.mxu0 0.0
    %104 = vmatpush1.msra.mxu0 0.0
    %105 = vmatprep.subr.mxu0 0.0
    %106 = vmatpush1.msra.mxu0 0.0
    %107 = vmatprep.subr.mxu0 0.0
    %108 = vmatpush1.msra.mxu0 0.0
    %109 = vmatprep.subr.mxu0 0.0
    %110 = vmatpush1.msra.mxu0 0.0
    %111 = vmatprep.subr.mxu0 0.0
    %112 = vmatpush1.msra.mxu0 0.0
    %113 = vmatprep.mubr.f32.mxu0 0.0
    %114 = vmatmul.mubr.f32.gmra.mrb[0].mxu0 %v47
    %v115 = vpop.f32.mrb[0].mxu0
    %v116 = vadd.f32 %v44, %v115
    %v117 = vpop.f32.mrb[0].mxu0
    %118 = vdwg.mxu0
    %v119 = vmax.f32 %v116, 0.0
    %vm120 = vcmask 122880
    %121 = vst.msk [vmem:[#allocation7] sm:$0x1] %vm120, %v119
    // Predicated region
    $region22: #{tpu_custom_call.1} parent=1 // pred_check
      _
    $region23: #{tpu_custom_call.1} parent=1 // pred_check_branch
      %123 = sbr.rel (0) target = $region25
    $region24: #{tpu_custom_call.1} parent=1 // pred_region
      %s125 = ssub.s32 16, 16
      %126 = vsyncadd [#allocation4], %s125
      %s128 = sshll.u32 [#allocation7], 4
      %s129 = int_to_ptr.vmem [resolvable:$true] %s128
      %131 = dma.vmem_to_hbm [thread:$0]  %s129, 16, %s3, [#allocation4]
    $region25: #{tpu_custom_call.1} parent=1 // pred_fallthru
      _
    // Predicated region
    $region26: #{tpu_custom_call.1} parent=1 // pred_check
      _
    $region27: #{tpu_custom_call.1} parent=1 // pred_check_branch
      %133 = sbr.rel (0) target = $region29
    $region28: #{tpu_custom_call.1} parent=1 // pred_region
      %134 = dma.done [#allocation4], 16
    $region29: #{tpu_custom_call.1} parent=1 // pred_fallthru
      _
    %135 = vsyncpa [#allocation3], 1
    %136 = vsyncpa [#allocation6], 1
    %137 = vsyncpa [#allocation4], 1

</llo_original>
